<compile_context>
chip_gen: v7x
topology: tpu7x:2x2x1
jax: 0.10.0
libtpu: 0.0.40
codegen_flags: <defaults>
</compile_context>

<pallas_src>
import functools

import jax
import jax.numpy as jnp
from jax.experimental import pallas as pl
from jax.experimental.pallas import tpu as pltpu


def _round_up(x, m):
    return ((x + m - 1) // m) * m


def _round_down(x, m):
    return (x // m) * m


def _device_kind():
    try:
        return jax.devices()[0].device_kind.lower()
    except Exception:
        return ""


def _vmem_capacity_bytes():
    """Physical per-core VMEM; conservative 64 MiB fallback (v7x)."""
    try:
        info = pltpu.get_tpu_info()
        for attr in ("vmem_capacity_bytes", "vmem_bytes"):
            v = getattr(info, attr, None)
            if v:
                return int(v)
    except Exception:
        pass
    return 64 << 20


def _num_tensorcores(kind):
    """TensorCores reachable via the 'parallel' grid axis (megacore sharding)."""
    if not kind:
        return 1
    if "v7" in kind or "v4" in kind:
        return 2
    if "v5p" in kind or ("v5" in kind and "lite" not in kind and "v5e" not in kind):
        return 2
    return 1          # v5e / v6e / unknown -> single TC, don't split


def _is_v5e(kind):
    return ("v5e" in kind) or ("v5 lite" in kind) or ("v5lite" in kind)


def _choose_tile_hw(hw, max_tile):
    """Spatial tile: full HW if it fits, else a 128-multiple near max_tile."""
    if hw <= max_tile:
        return hw
    for t in range(max_tile, 127, -128):        # prefer an exact divisor
        if hw % t == 0:
            return t
    return max_tile                              # ragged last tile -> masked


def _choose_block_batch(b, c, tile_hw, itemsize, target_bytes, num_tc):
    """Fold batch elements so the x block is ~target_bytes (and B % Bt == 0)."""
    per_batch = max(1, c * tile_hw * itemsize)
    bt = max(1, min(b, target_bytes // per_batch))
    if num_tc > 1 and b >= num_tc:
        bt = min(bt, b // num_tc)                # only split for 2-TC chips
    bt = max(bt, 1)
    while b % bt:
        bt -= 1
    if num_tc > 1:
        # Prefer a tile count that's a multiple of num_tc (load balance).
        if (b // bt) % num_tc != 0:
            cand = bt
            while cand > 1:
                cand -= 1
                if b % cand == 0 and (b // cand) % num_tc == 0:
                    bt = cand
                    break
    return bt


def _channel_attention_kernel(x_ref, w1_ref, b1_ref, w2_ref, b2_ref, o_ref,
                              pool_acc, *,
                              hw_total, tile_hw, needs_mask, block_batch,
                              max_in_input_dtype):
    hw = pl.program_id(1)
    n_hw = pl.num_programs(1)
    bt = block_batch
    cc = pool_acc.shape[-1]

    @pl.when(hw == 0)
    def _init():
        pool_acc[0:bt, :] = jnp.zeros((bt, cc), jnp.float32)          # sum rows
        pool_acc[bt:2 * bt, :] = jnp.full((bt, cc), -jnp.inf, jnp.float32)  # max rows

    def _accum_full():
        # Hot path: no mask, ~cast + add + max per streamed element.
        x = x_ref[...]                                        # (Bt, C, TILE_HW)
        pool_acc[0:bt, :] += jnp.sum(x.astype(jnp.float32), axis=-1)
        if max_in_input_dtype:
            m = jnp.max(x, axis=-1).astype(jnp.float32)       # exact in bf16
        else:
            m = jnp.max(x.astype(jnp.float32), axis=-1)       # v5e: no bf16 VPU
        pool_acc[bt:2 * bt, :] = jnp.maximum(pool_acc[bt:2 * bt, :], m)

    def _accum_masked():
        # Ragged last tile only: neutralize padded lanes (sum: 0, max: -inf).
        x = x_ref[...].astype(jnp.float32)
        lane = jax.lax.broadcasted_iota(jnp.int32, x.shape, 2)
        valid = (hw * tile_hw + lane) < hw_total
        pool_acc[0:bt, :] += jnp.sum(jnp.where(valid, x, 0.0), axis=-1)
        m = jnp.max(jnp.where(valid, x, -jnp.inf), axis=-1)
        pool_acc[bt:2 * bt, :] = jnp.maximum(pool_acc[bt:2 * bt, :], m)

    if needs_mask:
        pl.when(hw < n_hw - 1)(_accum_full)
        pl.when(hw == n_hw - 1)(_accum_masked)
    else:
        _accum_full()

    @pl.when(hw == n_hw - 1)
    def _finalize():
        # Turn the sum rows into averages in place, then feed the whole
        # (2*Bt, C) scratch to the MXU (shared MLP on avg & max in one matmul).
        pool_acc[0:bt, :] = pool_acc[0:bt, :] * (1.0 / float(hw_total))
        pooled = pool_acc[...]                                         # (2Bt, C)
        h = jnp.dot(pooled, w1_ref[...],
                    preferred_element_type=jnp.float32) + b1_ref[...]
        h = jnp.maximum(h, 0.0)                                        # ReLU
        y = jnp.dot(h, w2_ref[...],
                    preferred_element_type=jnp.float32) + b2_ref[...]
        att = jax.nn.sigmoid(y[0:bt] + y[bt:2 * bt])                   # (Bt, C)
        o_ref[0] = att.astype(o_ref.dtype)


def channel_attention(x, w1, b1, w2, b2, *, tile_hw=None, block_batch=None):
    """x: (B, C, H, W). Returns sigmoid channel-attention weights (B, C, 1, 1)."""
    B, C, H, W = x.shape
    mid = w1.shape[1]
    HW = H * W
    xr = x.reshape(B, C, HW)
    itemsize = xr.dtype.itemsize

    kind = _device_kind()
    num_tc = _num_tensorcores(kind)
    vmem_cap = _vmem_capacity_bytes()

    # --- VMEM budget (generation-aware) ------------------------------------
    weight_bytes = 4 * (w1.size + b1.size + w2.size + b2.size)
    budget = min((vmem_cap * 3) // 4, 96 << 20)          # pipeline + scratch budget
    # Reserve for weight double-buffers + compiler slack; rest is for x blocks.
    avail_x = max(budget - 2 * weight_bytes - (2 << 20), 1 << 20)

    # --- spatial tile --------------------------------------------------------
    if tile_hw is None:
        # Largest tile a single-batch double-buffered block can afford.
        max_tile_hw = max(512, _round_down(avail_x // (2 * C * itemsize), 128))
        tile_hw = _choose_tile_hw(HW, max_tile_hw)
    tile_hw = min(tile_hw, HW)
    if tile_hw < HW:
        tile_hw = _round_up(tile_hw, 128)   # tiled lane dim must be 128-aligned
        if tile_hw >= HW:
            tile_hw = HW                    # full-dim block (any width is legal)
    n_hw = pl.cdiv(HW, tile_hw)
    needs_mask = (HW % tile_hw) != 0

    # --- batch tile ----------------------------------------------------------
    if block_batch is None:
        target = min(8 << 20, avail_x // 2)   # ~8 MiB blocks amortize step cost
        block_batch = _choose_block_batch(B, C, tile_hw, itemsize, target, num_tc)
    bt = block_batch
    assert B % bt == 0, "block_batch must divide B"
    n_bt = B // bt

    # --- budget check (x double-buffers + weights + scratch + output) -------
    block_bytes = bt * C * tile_hw * itemsize
    usage = (2 * block_bytes + 2 * weight_bytes
             + 2 * bt * C * 4            # pooled scratch
             + 2 * bt * C * 4            # output double-buffer
             + (1 << 20))                # slack
    # TODO(synk): if even bt=1 / tile_hw=128 exceeds the budget (C in the many
    # thousands), add a channel-tile grid axis instead of asserting.
    assert usage <= budget, (
        f"VMEM budget exceeded: need ~{usage >> 20} MiB, budget {budget >> 20} MiB")
    vmem_limit = min(int(vmem_cap * 0.9), max(usage + (8 << 20), 32 << 20))

    kernel = functools.partial(
        _channel_attention_kernel,
        hw_total=HW, tile_hw=tile_hw, needs_mask=needs_mask, block_batch=bt,
        max_in_input_dtype=not _is_v5e(kind))

    # Advisory cost: memory-bound (reads ~B*C*HW elements, negligible MXU work).
    cost = pl.CostEstimate(
        flops=2 * B * C * HW + 8 * B * C * mid,
        transcendentals=B * C,
        bytes_accessed=xr.size * itemsize
        + 4 * (w1.size + b1.size + w2.size + b2.size + B * C),
    )

    out = pl.pallas_call(
        kernel,
        out_shape=jax.ShapeDtypeStruct((n_bt, bt, C), jnp.float32),
        grid=(n_bt, n_hw),
        in_specs=[
            pl.BlockSpec((bt, C, tile_hw), lambda b, h: (b, 0, h)),  # x stream
            pl.BlockSpec((C, mid), lambda b, h: (0, 0)),             # W1 (VMEM-resident)
            pl.BlockSpec((1, mid), lambda b, h: (0, 0)),             # b1
            pl.BlockSpec((mid, C), lambda b, h: (0, 0)),             # W2
            pl.BlockSpec((1, C), lambda b, h: (0, 0)),               # b2
        ],
        out_specs=pl.BlockSpec((1, bt, C), lambda b, h: (b, 0, 0)),
        scratch_shapes=[
            pltpu.VMEM((2 * bt, C), jnp.float32),   # rows [0:bt]=sum, [bt:2bt]=max
        ],
        compiler_params=pltpu.CompilerParams(
            dimension_semantics=("parallel", "arbitrary"),
            vmem_limit_bytes=vmem_limit),
        cost_estimate=cost,
    )(xr, w1, b1, w2, b2)

    return out.reshape(B, C, 1, 1)


def _reference(x, w1, b1, w2, b2):
    B, C = x.shape[0], x.shape[1]
    xf = x.astype(jnp.float32).reshape(B, C, -1)
    avg_v = xf.mean(axis=-1)
    max_v = xf.max(axis=-1)

    def mlp(v):
        return jnp.maximum(v @ w1 + b1, 0.0) @ w2 + b2

    return jax.nn.sigmoid(mlp(avg_v) + mlp(max_v)).reshape(B, C, 1, 1)


if __name__ == "__main__":
    key = jax.random.PRNGKey(0)
    k_main, k_p1, k_odd, k_tile, k_p3, k_bf = jax.random.split(key, 6)

    def make_params(k, C, mid):
        k2, k3, k4, k5 = jax.random.split(k, 4)
        # (in, out) layout, equivalent to PyTorch's v @ W.T with W (out, in).
        w1 = 0.1 * jax.random.normal(k2, (C, mid), jnp.float32)
        b1 = 0.1 * jax.random.normal(k3, (1, mid), jnp.float32)
        w2 = 0.1 * jax.random.normal(k4, (mid, C), jnp.float32)
        b2 = 0.1 * jax.random.normal(k5, (1, C), jnp.float32)
        return w1, b1, w2, b2

    # Case 1: main shape (C=64, reduction=16 -> mid=4), aligned spatial dim.
    B, C, H, W = 2, 64, 16, 16
    w1, b1, w2, b2 = make_params(k_p1, C, C // 16)
    x = jax.random.normal(k_main, (B, C, H, W), jnp.float32)
    out = jax.block_until_ready(channel_attention(x, w1, b1, w2, b2))
    assert out.shape == (B, C, 1, 1)
    assert jnp.allclose(out, _reference(x, w1, b1, w2, b2), atol=1e-5, rtol=1e-5)

    # Case 2: spatial size not a multiple of 128 (7x7 = 49) — full-dim block.
    B, C, H, W = 2, 64, 7, 7
    x = jax.random.normal(k_odd, (B, C, H, W), jnp.float32)
    out = jax.block_until_ready(channel_attention(x, w1, b1, w2, b2))
    assert jnp.allclose(out, _reference(x, w1, b1, w2, b2), atol=1e-5, rtol=1e-5)

    # Case 3: multi-step spatial reduction; only the ragged LAST tile is masked.
    B, C, H, W = 2, 32, 18, 18            # HW = 324, tile_hw = 128 -> 3 hw steps
    w1c, b1c, w2c, b2c = make_params(k_p3, C, C // 8)
    x = jax.random.normal(k_tile, (B, C, H, W), jnp.float32)
    out = jax.block_until_ready(
        channel_attention(x, w1c, b1c, w2c, b2c, tile_hw=128))
    assert jnp.allclose(out, _reference(x, w1c, b1c, w2c, b2c), atol=1e-5, rtol=1e-5)

    # Case 4: bf16 activations (half the HBM traffic); sum accumulates in f32,
    # max runs in bf16 on bf16-VPU generations (exact either way).
    B, C, H, W = 2, 64, 16, 16
    x = jax.random.normal(k_bf, (B, C, H, W), jnp.float32).astype(jnp.bfloat16)
    out = jax.block_until_ready(channel_attention(x, w1, b1, w2, b2))
    assert jnp.allclose(out, _reference(x, w1, b1, w2, b2), atol=1e-4, rtol=1e-4)

    print("KERNEL_OK")
</pallas_src>

<mosaic_0001>
module attributes {stable_mosaic.version = 11 : i64} {
  func.func @_channel_attention_kernel(%arg0: i32, %arg1: i32, %arg2: memref<2x64x256xf32, #tpu.memory_space<vmem>>, %arg3: memref<64x4xf32, #tpu.memory_space<vmem>>, %arg4: memref<1x4xf32, #tpu.memory_space<vmem>>, %arg5: memref<4x64xf32, #tpu.memory_space<vmem>>, %arg6: memref<1x64xf32, #tpu.memory_space<vmem>>, %arg7: memref<1x2x64xf32, #tpu.memory_space<vmem>>, %arg8: memref<4x64xf32, #tpu.memory_space<vmem>>) attributes {dimension_semantics = [#tpu.dimension_semantics<parallel>, #tpu.dimension_semantics<arbitrary>], iteration_bounds = array<i64: 1, 1>, scalar_prefetch = 0 : i64, scratch_operands = 1 : i64, tpu.core_type = #tpu.core_type<tc>, window_params = [{transform_indices = @transform_0, window_bounds = array<i64: 2, 64, 256>}, {pipeline_mode = #tpu.pipeline_mode<synchronous>, transform_indices = @transform_1, window_bounds = array<i64: 64, 4>}, {pipeline_mode = #tpu.pipeline_mode<synchronous>, transform_indices = @transform_2, window_bounds = array<i64: 1, 4>}, {pipeline_mode = #tpu.pipeline_mode<synchronous>, transform_indices = @transform_3, window_bounds = array<i64: 4, 64>}, {pipeline_mode = #tpu.pipeline_mode<synchronous>, transform_indices = @transform_4, window_bounds = array<i64: 1, 64>}, {transform_indices = @transform_5, window_bounds = array<i64: 1, 2, 64>}]} {
    %c0_i32 = arith.constant 0 : i32
    %0 = arith.cmpi eq, %arg1, %c0_i32 : i32
    %1 = arith.extui %0 : i1 to i32
    %c0_i32_0 = arith.constant 0 : i32
    %2 = arith.cmpi ne, %1, %c0_i32_0 : i32
    scf.if %2 {
      %cst_13 = arith.constant 0.000000e+00 : f32
      %15 = vector.broadcast %cst_13 : f32 to vector<2x64xf32>
      %c0_14 = arith.constant 0 : index
      %c0_15 = arith.constant 0 : index
      %16 = vector.load %arg8[%c0_14, %c0_15] : memref<4x64xf32, #tpu.memory_space<vmem>>, vector<2x64xf32>
      tpu.vector_store %arg8[%c0_14, %c0_15], %15 {strides = array<i32>} : memref<4x64xf32, #tpu.memory_space<vmem>>, vector<2x64xf32>,
      %cst_16 = arith.constant 0xFF800000 : f32
      %17 = vector.broadcast %cst_16 : f32 to vector<2x64xf32>
      %c2_17 = arith.constant 2 : index
      %c0_18 = arith.constant 0 : index
      %18 = vector.load %arg8[%c2_17, %c0_18] : memref<4x64xf32, #tpu.memory_space<vmem>>, vector<2x64xf32>
      tpu.vector_store %arg8[%c2_17, %c0_18], %17 {strides = array<i32>} : memref<4x64xf32, #tpu.memory_space<vmem>>, vector<2x64xf32>,
    } else {
    }
    %c0 = arith.constant 0 : index
    %c0_1 = arith.constant 0 : index
    %c0_2 = arith.constant 0 : index
    %3 = vector.load %arg2[%c0, %c0_1, %c0_2] : memref<2x64x256xf32, #tpu.memory_space<vmem>>, vector<2x64x256xf32>
    %c0_3 = arith.constant 0 : index
    %c0_4 = arith.constant 0 : index
    %4 = vector.load %arg8[%c0_3, %c0_4] : memref<4x64xf32, #tpu.memory_space<vmem>>, vector<2x64xf32>
    %cst = arith.constant dense<0.000000e+00> : vector<2x64xf32>
    %5 = vector.multi_reduction <add>, %3, %cst [2] : vector<2x64x256xf32> to vector<2x64xf32>
    %6 = arith.addf %4, %5 : vector<2x64xf32>
    %c0_5 = arith.constant 0 : index
    %c0_6 = arith.constant 0 : index
    %7 = vector.load %arg8[%c0_5, %c0_6] : memref<4x64xf32, #tpu.memory_space<vmem>>, vector<2x64xf32>
    tpu.vector_store %arg8[%c0_5, %c0_6], %6 {strides = array<i32>} : memref<4x64xf32, #tpu.memory_space<vmem>>, vector<2x64xf32>,
    %cst_7 = arith.constant dense<0xFF800000> : vector<2x64xf32>
    %8 = vector.multi_reduction <maximumf>, %3, %cst_7 [2] : vector<2x64x256xf32> to vector<2x64xf32>
    %c2 = arith.constant 2 : index
    %c0_8 = arith.constant 0 : index
    %9 = vector.load %arg8[%c2, %c0_8] : memref<4x64xf32, #tpu.memory_space<vmem>>, vector<2x64xf32>
    %10 = arith.maximumf %9, %8 : vector<2x64xf32>
    %c2_9 = arith.constant 2 : index
    %c0_10 = arith.constant 0 : index
    %11 = vector.load %arg8[%c2_9, %c0_10] : memref<4x64xf32, #tpu.memory_space<vmem>>, vector<2x64xf32>
    tpu.vector_store %arg8[%c2_9, %c0_10], %10 {strides = array<i32>} : memref<4x64xf32, #tpu.memory_space<vmem>>, vector<2x64xf32>,
    %c0_i32_11 = arith.constant 0 : i32
    %12 = arith.cmpi eq, %arg1, %c0_i32_11 : i32
    %13 = arith.extui %12 : i1 to i32
    %c0_i32_12 = arith.constant 0 : i32
    %14 = arith.cmpi ne, %13, %c0_i32_12 : i32
    scf.if %14 {
      %c0_13 = arith.constant 0 : index
      %c0_14 = arith.constant 0 : index
      %15 = vector.load %arg8[%c0_13, %c0_14] : memref<4x64xf32, #tpu.memory_space<vmem>>, vector<2x64xf32>
      %cst_15 = arith.constant 3.906250e-03 : f32
      %16 = vector.broadcast %cst_15 : f32 to vector<2x64xf32>
      %17 = arith.mulf %15, %16 : vector<2x64xf32>
      %c0_16 = arith.constant 0 : index
      %c0_17 = arith.constant 0 : index
      %18 = vector.load %arg8[%c0_16, %c0_17] : memref<4x64xf32, #tpu.memory_space<vmem>>, vector<2x64xf32>
      tpu.vector_store %arg8[%c0_16, %c0_17], %17 {strides = array<i32>} : memref<4x64xf32, #tpu.memory_space<vmem>>, vector<2x64xf32>,
      %c0_18 = arith.constant 0 : index
      %c0_19 = arith.constant 0 : index
      %19 = vector.load %arg8[%c0_18, %c0_19] : memref<4x64xf32, #tpu.memory_space<vmem>>, vector<4x64xf32>
      %c0_20 = arith.constant 0 : index
      %c0_21 = arith.constant 0 : index
      %20 = vector.load %arg3[%c0_20, %c0_21] : memref<64x4xf32, #tpu.memory_space<vmem>>, vector<64x4xf32>
      %cst_22 = arith.constant dense<0.000000e+00> : vector<4x4xf32>
      %21 = tpu.matmul %19, %20, %cst_22 {dimension_numbers = #tpu.dot_dimension_numbers<[1], [0], [0], [1], [0, 0, 1, 1], [], []>} : vector<4x64xf32>, vector<64x4xf32>, vector<4x4xf32> -> vector<4x4xf32>
      %c0_23 = arith.constant 0 : index
      %c0_24 = arith.constant 0 : index
      %22 = vector.load %arg4[%c0_23, %c0_24] : memref<1x4xf32, #tpu.memory_space<vmem>>, vector<1x4xf32>
      %23 = vector.broadcast %22 : vector<1x4xf32> to vector<4x4xf32>
      %24 = arith.addf %21, %23 : vector<4x4xf32>
      %cst_25 = arith.constant 0.000000e+00 : f32
      %25 = vector.broadcast %cst_25 : f32 to vector<4x4xf32>
      %26 = arith.maximumf %24, %25 : vector<4x4xf32>
      %c0_26 = arith.constant 0 : index
      %c0_27 = arith.constant 0 : index
      %27 = vector.load %arg5[%c0_26, %c0_27] : memref<4x64xf32, #tpu.memory_space<vmem>>, vector<4x64xf32>
      %cst_28 = arith.constant dense<0.000000e+00> : vector<4x64xf32>
      %28 = tpu.matmul %26, %27, %cst_28 {dimension_numbers = #tpu.dot_dimension_numbers<[1], [0], [0], [1], [0, 0, 1, 1], [], []>} : vector<4x4xf32>, vector<4x64xf32>, vector<4x64xf32> -> vector<4x64xf32>
      %c0_29 = arith.constant 0 : index
      %c0_30 = arith.constant 0 : index
      %29 = vector.load %arg6[%c0_29, %c0_30] : memref<1x64xf32, #tpu.memory_space<vmem>>, vector<1x64xf32>
      %30 = vector.broadcast %29 : vector<1x64xf32> to vector<4x64xf32>
      %31 = arith.addf %28, %30 : vector<4x64xf32>
      %32 = vector.extract_strided_slice %31 {offsets = [0, 0], sizes = [2, 64], strides = [1, 1]} : vector<4x64xf32> to vector<2x64xf32>
      %33 = vector.extract_strided_slice %31 {offsets = [2, 0], sizes = [2, 64], strides = [1, 1]} : vector<4x64xf32> to vector<2x64xf32>
      %34 = arith.addf %32, %33 : vector<2x64xf32>
      %35 = arith.negf %34 : vector<2x64xf32>
      %36 = math.exp %35 : vector<2x64xf32>
      %cst_31 = arith.constant 1.000000e+00 : f32
      %37 = vector.broadcast %cst_31 : f32 to vector<2x64xf32>
      %38 = arith.addf %37, %36 : vector<2x64xf32>
      %39 = arith.divf %37, %38 : vector<2x64xf32>
      %c0_32 = arith.constant 0 : index
      %c0_33 = arith.constant 0 : index
      %c0_34 = arith.constant 0 : index
      %40 = vector.load %arg7[%c0_32, %c0_33, %c0_34] : memref<1x2x64xf32, #tpu.memory_space<vmem>>, vector<1x2x64xf32>
      %41 = vector.shape_cast %40 : vector<1x2x64xf32> to vector<2x64xf32>
      %42 = vector.shape_cast %39 : vector<2x64xf32> to vector<1x2x64xf32>
      tpu.vector_store %arg7[%c0_32, %c0_33, %c0_34], %42 {strides = array<i32>} : memref<1x2x64xf32, #tpu.memory_space<vmem>>, vector<1x2x64xf32>,
    } else {
    }
    return
  }
  func.func @transform_0(%arg0: i32, %arg1: i32) -> (i32, i32, i32) {
    %c0_i32 = arith.constant 0 : i32
    %c0_i32_0 = arith.constant 0 : i32
    return %arg0, %c0_i32, %arg1 : i32, i32, i32
  }
  func.func @transform_1(%arg0: i32, %arg1: i32) -> (i32, i32) {
    %c0_i32 = arith.constant 0 : i32
    %c0_i32_0 = arith.constant 0 : i32
    %c0_i32_1 = arith.constant 0 : i32
    return %c0_i32, %c0_i32_0 : i32, i32
  }
  func.func @transform_2(%arg0: i32, %arg1: i32) -> (i32, i32) {
    %c0_i32 = arith.constant 0 : i32
    %c0_i32_0 = arith.constant 0 : i32
    %c0_i32_1 = arith.constant 0 : i32
    return %c0_i32, %c0_i32_0 : i32, i32
  }
  func.func @transform_3(%arg0: i32, %arg1: i32) -> (i32, i32) {
    %c0_i32 = arith.constant 0 : i32
    %c0_i32_0 = arith.constant 0 : i32
    %c0_i32_1 = arith.constant 0 : i32
    return %c0_i32, %c0_i32_0 : i32, i32
  }
  func.func @transform_4(%arg0: i32, %arg1: i32) -> (i32, i32) {
    %c0_i32 = arith.constant 0 : i32
    %c0_i32_0 = arith.constant 0 : i32
    %c0_i32_1 = arith.constant 0 : i32
    return %c0_i32, %c0_i32_0 : i32, i32
  }
  func.func @transform_5(%arg0: i32, %arg1: i32) -> (i32, i32, i32) {
    %c0_i32 = arith.constant 0 : i32
    %c0_i32_0 = arith.constant 0 : i32
    %c0_i32_1 = arith.constant 0 : i32
    return %arg0, %c0_i32, %c0_i32_0 : i32, i32, i32
  }
}

</mosaic_0001>

<llo_original>
// kernel: tpu_custom_call.1
$region0: #{tpu_custom_call.1}
  #allocation0 [shape = 'u32[]', space=smem, size = 0x4, offset = 0x4, fixed_abs, tag = 'smem constant byte address 0x4 - core index']
  #allocation1 [shape = 'u32[144,128]{1,0:T(1,128)}', space=vmem, size = 0x12000, scoped, tag = 'internal scratch']
  #allocation2 [shape = 'f32[4,64]{1,0:T(4,128)}', space=vmem, size = 0x800, scoped, tag = 'scratch operand']
  %s0 = inlined_call_operand.hbm [shape: f32[2,64,256], index: 0, kind: input, shape index: {}]
  %s1 = inlined_call_operand.vmem [shape: f32[64,4], index: 1, kind: input, shape index: {}]
  %s2 = inlined_call_operand.vmem [shape: f32[1,4], index: 2, kind: input, shape index: {}]
  %s3 = inlined_call_operand.vmem [shape: f32[4,64], index: 3, kind: input, shape index: {}]
  %s4 = inlined_call_operand.vmem [shape: f32[1,64], index: 4, kind: input, shape index: {}]
  %s5 = inlined_call_operand.hbm [shape: f32[1,2,64], index: 5, kind: output, shape index: {}]
  %s6 = sld [smem:[#allocation0]]
  $region42: #{tpu_custom_call.1} parent=0
    _
  %s8 = ssub.s32 1, %s6
  %s9 = scalar_select 0, %s8, %s6
  $region1: #{tpu_custom_call.1} parent=0
    #allocation3 [shape = 'u8[131072]{0}', space=vmem, size = 0x20000, scoped, tag = 'input window, operand 0, single buffered']
    #allocation4 [shape = 's32[1]{0}', space=sflag, size = 0x4, scoped, tag = 'scoped memory for tpu_custom_call.1']
    #allocation5 [shape = 's32[1]{0}', space=sflag, size = 0x4, scoped, tag = 'scoped memory for tpu_custom_call.1']
    #allocation6 [shape = 'u8[1024]{0}', space=vmem, size = 0x400, scoped, tag = 'output window, operand 0, single buffered']
    %10 = vsyncpa [#allocation4], 0
    %11 = vsyncpa [#allocation5], 0
    // Predicated region
    $region2: #{tpu_custom_call.1} parent=1 // pred_check
      _
    $region3: #{tpu_custom_call.1} parent=1 // pred_check_branch
      %13 = sbr.rel (0) target = $region5
    $region4: #{tpu_custom_call.1} parent=1 // pred_region
      %s15 = ssub.s32 4096, 4096
      %16 = vsyncadd [#allocation4], %s15
      %s17 = sshll.u32 [#allocation3], 4
      %s18 = int_to_ptr.vmem [resolvable:$true] %s17
      %23 = dma.hbm_to_vmem [thread:$0]  %s0, 4096, %s18, [#allocation4], 256, 256, 16
    $region5: #{tpu_custom_call.1} parent=1 // pred_fallthru
      _
    // Predicated region
    $region6: #{tpu_custom_call.1} parent=1 // pred_check
      _
    $region7: #{tpu_custom_call.1} parent=1 // pred_check_branch
      %25 = sbr.rel (0) target = $region9
    $region8: #{tpu_custom_call.1} parent=1 // pred_region
      _
    $region9: #{tpu_custom_call.1} parent=1 // pred_fallthru
      _
    // Predicated region
    $region10: #{tpu_custom_call.1} parent=1 // pred_check
      _
    $region11: #{tpu_custom_call.1} parent=1 // pred_check_branch
      %27 = sbr.rel (0) target = $region13
    $region12: #{tpu_custom_call.1} parent=1 // pred_region
      _
    $region13: #{tpu_custom_call.1} parent=1 // pred_fallthru
      _
    // Predicated region
    $region14: #{tpu_custom_call.1} parent=1 // pred_check
      _
    $region15: #{tpu_custom_call.1} parent=1 // pred_check_branch
      %29 = sbr.rel (0) target = $region17
    $region16: #{tpu_custom_call.1} parent=1 // pred_region
      _
    $region17: #{tpu_custom_call.1} parent=1 // pred_fallthru
      _
    // Predicated region
    $region18: #{tpu_custom_call.1} parent=1 // pred_check
      _
    $region19: #{tpu_custom_call.1} parent=1 // pred_check_branch
      %31 = sbr.rel (0) target = $region21
    $region20: #{tpu_custom_call.1} parent=1 // pred_region
      _
    $region21: #{tpu_custom_call.1} parent=1 // pred_fallthru
      _
    // Predicated region
    $region22: #{tpu_custom_call.1} parent=1 // pred_check
      _
    $region23: #{tpu_custom_call.1} parent=1 // pred_check_branch
      %33 = sbr.rel (0) target = $region25
    $region24: #{tpu_custom_call.1} parent=1 // pred_region
      %34 = dma.done [#allocation4], 4096
    $region25: #{tpu_custom_call.1} parent=1 // pred_fallthru
      _
    %p35 = scmp.eq.s32.totalorder 0, 0
    // Predicated region
    $region26: #{tpu_custom_call.1} parent=1 // pred_check
      %p36 = pneg %p35
    $region27: #{tpu_custom_call.1} parent=1 // pred_check_branch
      %38 = sbr.rel (%p36) target = $region29
    $region28: #{tpu_custom_call.1} parent=1 // pred_region
      %vm39 = vcmask 517120
      %40 = vst.msk [vmem:[#allocation2] sm:$0x3] %vm39, 0.0
      %41 = vst.msk [vmem:[#allocation2 + $0x2] sm:$0x3] %vm39, -inf
    $region29: #{tpu_custom_call.1} parent=1 // pred_fallthru
      _
    %v42 = vld [vmem:[#allocation3] sm:$0xff]
    %v43 = vld [vmem:[#allocation3 + $0x8] sm:$0xff]
    %v44 = vld [vmem:[#allocation3 + $0x10] sm:$0xff]
    %v45 = vld [vmem:[#allocation3 + $0x18] sm:$0xff]
    %v46 = vld [vmem:[#allocation3 + $0x20] sm:$0xff]
    %v47 = vld [vmem:[#allocation3 + $0x28] sm:$0xff]
    %v48 = vld [vmem:[#allocation3 + $0x30] sm:$0xff]
    %v49 = vld [vmem:[#allocation3 + $0x38] sm:$0xff]
    %v50 = vld [vmem:[#allocation3 + $0x40] sm:$0xff]
    %v51 = vld [vmem:[#allocation3 + $0x48] sm:$0xff]
    %v52 = vld [vmem:[#allocation3 + $0x50] sm:$0xff]
    %v53 = vld [vmem:[#allocation3 + $0x58] sm:$0xff]
    %v54 = vld [vmem:[#allocation3 + $0x60] sm:$0xff]
    %v55 = vld [vmem:[#allocation3 + $0x68] sm:$0xff]
    %v56 = vld [vmem:[#allocation3 + $0x70] sm:$0xff]
    %v57 = vld [vmem:[#allocation3 + $0x78] sm:$0xff]
    %v58 = vld [vmem:[#allocation3 + $0x80] sm:$0xff]
    %v59 = vld [vmem:[#allocation3 + $0x88] sm:$0xff]
    %v60 = vld [vmem:[#allocation3 + $0x90] sm:$0xff]
    %v61 = vld [vmem:[#allocation3 + $0x98] sm:$0xff]
    %v62 = vld [vmem:[#allocation3 + $0xa0] sm:$0xff]
    %v63 = vld [vmem:[#allocation3 + $0xa8] sm:$0xff]
    %v64 = vld [vmem:[#allocation3 + $0xb0] sm:$0xff]
    %v65 = vld [vmem:[#allocation3 + $0xb8] sm:$0xff]
    %v66 = vld [vmem:[#allocation3 + $0xc0] sm:$0xff]
    %v67 = vld [vmem:[#allocation3 + $0xc8] sm:$0xff]
    %v68 = vld [vmem:[#allocation3 + $0xd0] sm:$0xff]
    %v69 = vld [vmem:[#allocation3 + $0xd8] sm:$0xff]
    %v70 = vld [vmem:[#allocation3 + $0xe0] sm:$0xff]
    %v71 = vld [vmem:[#allocation3 + $0xe8] sm:$0xff]
    %v72 = vld [vmem:[#allocation3 + $0xf0] sm:$0xff]
    %v73 = vld [vmem:[#allocation3 + $0xf8] sm:$0xff]
    %v74 = vld [vmem:[#allocation2] sm:$0x3]
    %v75 = vadd.f32 %v42, %v43
    %76 = vadd.xlane.f32.xlu0 %v75
    %v77 = vpop.xlane.xlu0 %76
    %v78 = vadd.f32 %v44, %v45
    %79 = vadd.xlane.f32.xlu0 %v78
    %v80 = vpop.xlane.xlu0 %79
    %v81 = vadd.f32 %v46, %v47
    %82 = vadd.xlane.f32.xlu0 %v81
    %v83 = vpop.xlane.xlu0 %82
    %v84 = vadd.f32 %v48, %v49
    %85 = vadd.xlane.f32.xlu0 %v84
    %v86 = vpop.xlane.xlu0 %85
    %v87 = vadd.f32 %v50, %v51
    %88 = vadd.xlane.f32.xlu0 %v87
    %v89 = vpop.xlane.xlu0 %88
    %v90 = vadd.f32 %v52, %v53
    %91 = vadd.xlane.f32.xlu0 %v90
    %v92 = vpop.xlane.xlu0 %91
    %v93 = vadd.f32 %v54, %v55
    %94 = vadd.xlane.f32.xlu0 %v93
    %v95 = vpop.xlane.xlu0 %94
    %v96 = vadd.f32 %v56, %v57
    %97 = vadd.xlane.f32.xlu0 %v96
    %v98 = vpop.xlane.xlu0 %97
    %v99 = vadd.f32 %v58, %v59
    %100 = vadd.xlane.f32.xlu0 %v99
    %v101 = vpop.xlane.xlu0 %100
    %v102 = vadd.f32 %v60, %v61
    %103 = vadd.xlane.f32.xlu0 %v102
    %v104 = vpop.xlane.xlu0 %103
    %v105 = vadd.f32 %v62, %v63
    %106 = vadd.xlane.f32.xlu0 %v105
    %v107 = vpop.xlane.xlu0 %106
    %v108 = vadd.f32 %v64, %v65
    %109 = vadd.xlane.f32.xlu0 %v108
    %v110 = vpop.xlane.xlu0 %109
    %v111 = vadd.f32 %v66, %v67
    %112 = vadd.xlane.f32.xlu0 %v111
    %v113 = vpop.xlane.xlu0 %112
    %v114 = vadd.f32 %v68, %v69
    %115 = vadd.xlane.f32.xlu0 %v114
    %v116 = vpop.xlane.xlu0 %115
    %v117 = vadd.f32 %v70, %v71
    %118 = vadd.xlane.f32.xlu0 %v117
    %v119 = vpop.xlane.xlu0 %118
    %v120 = vadd.f32 %v72, %v73
    %121 = vadd.xlane.f32.xlu0 %v120
    %v122 = vpop.xlane.xlu0 %121
    %v139 = vlaneseq
    %v140 = vand.u32 %v139, 127
    %v141 = vlaneseq
    %v142 = vshrl.u32 %v141, 7
    %v143 = vsub.s32 %v140, %v142
    %v144 = vrot.slane %v77, %v143
    %v145 = vadd.s32 %v140, 4294967288
    %v146 = vlaneseq
    %v147 = vshrl.u32 %v146, 7
    %v148 = vsub.s32 %v145, %v147
    %v149 = vrot.slane %v80, %v148
    %vm150 = vcmask 130112
    %v151 = vsel %vm150, %v149, %v144
    %v152 = vadd.s32 %v140, 4294967280
    %v153 = vlaneseq
    %v154 = vshrl.u32 %v153, 7
    %v155 = vsub.s32 %v152, %v154
    %v156 = vrot.slane %v83, %v155
    %vm157 = vcmask 195712
    %v158 = vsel %vm157, %v156, %v151
    %v159 = vadd.s32 %v140, 4294967272
    %v160 = vlaneseq
    %v161 = vshrl.u32 %v160, 7
    %v162 = vsub.s32 %v159, %v161
    %v163 = vrot.slane %v86, %v162
    %vm164 = vcmask 261312
    %v165 = vsel %vm164, %v163, %v158
    %v166 = vadd.s32 %v140, 4294967264
    %v167 = vlaneseq
    %v168 = vshrl.u32 %v167, 7
    %v169 = vsub.s32 %v166, %v168
    %v170 = vrot.slane %v89, %v169
    %vm171 = vcmask 326912
    %v172 = vsel %vm171, %v170, %v165
    %v173 = vadd.s32 %v140, 4294967256
    %v174 = vlaneseq
    %v175 = vshrl.u32 %v174, 7
    %v176 = vsub.s32 %v173, %v175
    %v177 = vrot.slane %v92, %v176
    %vm178 = vcmask 392512
    %v179 = vsel %vm178, %v177, %v172
    %v180 = vadd.s32 %v140, 4294967248
    %v181 = vlaneseq
    %v182 = vshrl.u32 %v181, 7
    %v183 = vsub.s32 %v180, %v182
    %v184 = vrot.slane %v95, %v183
    %vm185 = vcmask 458112
    %v186 = vsel %vm185, %v184, %v179
    %v187 = vadd.s32 %v140, 4294967240
    %v188 = vlaneseq
    %v189 = vshrl.u32 %v188, 7
    %v190 = vsub.s32 %v187, %v189
    %v191 = vrot.slane %v98, %v190
    %vm192 = vcmask 523712
    %v193 = vsel %vm192, %v191, %v186
    %v194 = vlaneseq
    %v195 = vshrl.u32 %v194, 7
    %v196 = vsub.s32 %v140, %v195
    %v197 = vrot.slane %v101, %v196
    %v198 = vlaneseq
    %v199 = vshrl.u32 %v198, 7
    %v200 = vsub.s32 %v145, %v199
    %v201 = vrot.slane %v104, %v200
    %v202 = vsel %vm150, %v201, %v197
    %v203 = vlaneseq
    %v204 = vshrl.u32 %v203, 7
    %v205 = vsub.s32 %v152, %v204
    %v206 = vrot.slane %v107, %v205
    %v207 = vsel %vm157, %v206, %v202
    %v208 = vlaneseq
    %v209 = vshrl.u32 %v208, 7
    %v210 = vsub.s32 %v159, %v209
    %v211 = vrot.slane %v110, %v210
    %v212 = vsel %vm164, %v211, %v207
    %v213 = vlaneseq
    %v214 = vshrl.u32 %v213, 7
    %v215 = vsub.s32 %v166, %v214
    %v216 = vrot.slane %v113, %v215
    %v217 = vsel %vm171, %v216, %v212
    %v218 = vlaneseq
    %v219 = vshrl.u32 %v218, 7
    %v220 = vsub.s32 %v173, %v219
    %v221 = vrot.slane %v116, %v220
    %v222 = vsel %vm178, %v221, %v217
    %v223 = vlaneseq
    %v224 = vshrl.u32 %v223, 7
    %v225 = vsub.s32 %v180, %v224
    %v226 = vrot.slane %v119, %v225
    %v227 = vsel %vm185, %v226, %v222
    %v228 = vlaneseq
    %v229 = vshrl.u32 %v228, 7
    %v230 = vsub.s32 %v187, %v229
    %v231 = vrot.slane %v122, %v230
    %v232 = vsel %vm192, %v231, %v227
    %vm233 = vcmask 1041409
    %v234 = vsel %vm233, %v232, %v193
    %v236 = vadd.f32 %v74, %v234
    %vm237 = vcmask 517120
    %238 = vst.msk [vmem:[#allocation2] sm:$0x3] %vm237, %v236
    %v239 = vmax.f32 %v42, %v43
    %240 = vmax.xlane.f32.xlu0 %v239
    %v241 = vpop.xlane.xlu0 %240
    %v242 = vmax.f32 %v44, %v45
    %243 = vmax.xlane.f32.xlu0 %v242
    %v244 = vpop.xlane.xlu0 %243
    %v245 = vmax.f32 %v46, %v47
    %246 = vmax.xlane.f32.xlu0 %v245
    %v247 = vpop.xlane.xlu0 %246
    %v248 = vmax.f32 %v48, %v49
    %249 = vmax.xlane.f32.xlu0 %v248
    %v250 = vpop.xlane.xlu0 %249
    %v251 = vmax.f32 %v50, %v51
    %252 = vmax.xlane.f32.xlu0 %v251
    %v253 = vpop.xlane.xlu0 %252
    %v254 = vmax.f32 %v52, %v53
    %255 = vmax.xlane.f32.xlu0 %v254
    %v256 = vpop.xlane.xlu0 %255
    %v257 = vmax.f32 %v54, %v55
    %258 = vmax.xlane.f32.xlu0 %v257
    %v259 = vpop.xlane.xlu0 %258
    %v260 = vmax.f32 %v56, %v57
    %261 = vmax.xlane.f32.xlu0 %v260
    %v262 = vpop.xlane.xlu0 %261
    %v263 = vmax.f32 %v58, %v59
    %264 = vmax.xlane.f32.xlu0 %v263
    %v265 = vpop.xlane.xlu0 %264
    %v266 = vmax.f32 %v60, %v61
    %267 = vmax.xlane.f32.xlu0 %v266
    %v268 = vpop.xlane.xlu0 %267
    %v269 = vmax.f32 %v62, %v63
    %270 = vmax.xlane.f32.xlu0 %v269
    %v271 = vpop.xlane.xlu0 %270
    %v272 = vmax.f32 %v64, %v65
    %273 = vmax.xlane.f32.xlu0 %v272
    %v274 = vpop.xlane.xlu0 %273
    %v275 = vmax.f32 %v66, %v67
    %276 = vmax.xlane.f32.xlu0 %v275
    %v277 = vpop.xlane.xlu0 %276
    %v278 = vmax.f32 %v68, %v69
    %279 = vmax.xlane.f32.xlu0 %v278
    %v280 = vpop.xlane.xlu0 %279
    %v281 = vmax.f32 %v70, %v71
    %282 = vmax.xlane.f32.xlu0 %v281
    %v283 = vpop.xlane.xlu0 %282
    %v284 = vmax.f32 %v72, %v73
    %285 = vmax.xlane.f32.xlu0 %v284
    %v286 = vpop.xlane.xlu0 %285
    %v287 = vld [vmem:[#allocation2 + $0x2] sm:$0x3]
    %v304 = vlaneseq
    %v305 = vshrl.u32 %v304, 7
    %v306 = vsub.s32 %v140, %v305
    %v307 = vrot.slane %v241, %v306
    %v308 = vlaneseq
    %v309 = vshrl.u32 %v308, 7
    %v310 = vsub.s32 %v145, %v309
    %v311 = vrot.slane %v244, %v310
    %v312 = vsel %vm150, %v311, %v307
    %v313 = vlaneseq
    %v314 = vshrl.u32 %v313, 7
    %v315 = vsub.s32 %v152, %v314
    %v316 = vrot.slane %v247, %v315
    %v317 = vsel %vm157, %v316, %v312
    %v318 = vlaneseq
    %v319 = vshrl.u32 %v318, 7
    %v320 = vsub.s32 %v159, %v319
    %v321 = vrot.slane %v250, %v320
    %v322 = vsel %vm164, %v321, %v317
    %v323 = vlaneseq
    %v324 = vshrl.u32 %v323, 7
    %v325 = vsub.s32 %v166, %v324
    %v326 = vrot.slane %v253, %v325
    %v327 = vsel %vm171, %v326, %v322
    %v328 = vlaneseq
    %v329 = vshrl.u32 %v328, 7
    %v330 = vsub.s32 %v173, %v329
    %v331 = vrot.slane %v256, %v330
    %v332 = vsel %vm178, %v331, %v327
    %v333 = vlaneseq
    %v334 = vshrl.u32 %v333, 7
    %v335 = vsub.s32 %v180, %v334
    %v336 = vrot.slane %v259, %v335
    %v337 = vsel %vm185, %v336, %v332
    %v338 = vlaneseq
    %v339 = vshrl.u32 %v338, 7
    %v340 = vsub.s32 %v187, %v339
    %v341 = vrot.slane %v262, %v340
    %v342 = vsel %vm192, %v341, %v337
    %v343 = vlaneseq
    %v344 = vshrl.u32 %v343, 7
    %v345 = vsub.s32 %v140, %v344
    %v346 = vrot.slane %v265, %v345
    %v347 = vlaneseq
    %v348 = vshrl.u32 %v347, 7
    %v349 = vsub.s32 %v145, %v348
    %v350 = vrot.slane %v268, %v349
    %v351 = vsel %vm150, %v350, %v346
    %v352 = vlaneseq
    %v353 = vshrl.u32 %v352, 7
    %v354 = vsub.s32 %v152, %v353
    %v355 = vrot.slane %v271, %v354
    %v356 = vsel %vm157, %v355, %v351
    %v357 = vlaneseq
    %v358 = vshrl.u32 %v357, 7
    %v359 = vsub.s32 %v159, %v358
    %v360 = vrot.slane %v274, %v359
    %v361 = vsel %vm164, %v360, %v356
    %v362 = vlaneseq
    %v363 = vshrl.u32 %v362, 7
    %v364 = vsub.s32 %v166, %v363
    %v365 = vrot.slane %v277, %v364
    %v366 = vsel %vm171, %v365, %v361
    %v367 = vlaneseq
    %v368 = vshrl.u32 %v367, 7
    %v369 = vsub.s32 %v173, %v368
    %v370 = vrot.slane %v280, %v369
    %v371 = vsel %vm178, %v370, %v366
    %v372 = vlaneseq
    %v373 = vshrl.u32 %v372, 7
    %v374 = vsub.s32 %v180, %v373
    %v375 = vrot.slane %v283, %v374
    %v376 = vsel %vm185, %v375, %v371
    %v377 = vlaneseq
    %v378 = vshrl.u32 %v377, 7
    %v379 = vsub.s32 %v187, %v378
    %v380 = vrot.slane %v286, %v379
    %v381 = vsel %vm192, %v380, %v376
    %v382 = vsel %vm233, %v381, %v342
    %v384 = vmax.f32 %v287, %v382
    %385 = vst.msk [vmem:[#allocation2 + $0x2] sm:$0x3] %vm237, %v384
    // Predicated region
    $region30: #{tpu_custom_call.1} parent=1 // pred_check
      %p386 = pneg %p35
    $region31: #{tpu_custom_call.1} parent=1 // pred_check_branch
      %388 = sbr.rel (%p386) target = $region33
    $region32: #{tpu_custom_call.1} parent=1 // pred_region
      %v389 = vld [vmem:[#allocation2] sm:$0x3]
      %v390 = vmul.f32 %v389, 0.00390625
      %391 = vst.msk [vmem:[#allocation2] sm:$0x3] %vm237, %v390
      %v392 = vld [vmem:[#allocation2] sm:$0xf]
      %v393 = vld [vmem:[%s1] sm:$0xff]
      %v394 = vld [vmem:[%s1 + $0x8] sm:$0xff]
      %v395 = vld [vmem:[%s1 + $0x10] sm:$0xff]
      %v396 = vld [vmem:[%s1 + $0x18] sm:$0xff]
      %v397 = vld [vmem:[%s1 + $0x20] sm:$0xff]
      %v398 = vld [vmem:[%s1 + $0x28] sm:$0xff]
      %v399 = vld [vmem:[%s1 + $0x30] sm:$0xff]
      %v400 = vld [vmem:[%s1 + $0x38] sm:$0xff]
      %v401 = vld [vmem:[%s2] sm:$0x1]
      %v403 = vlaneseq
      %v404 = vshrl.u32 %v403, 7
      %v405 = vsub.s32 0, %v404
      %v406 = vrot.slane %v401, %v405
      %vm408 = vcmask 523264
      %v410 = vsel %vm408, %v392, 0
      %412 = vmatprep.subr.mxu0 0.0
      %413 = vmatpush1.msra.mxu0 %v393
      %414 = vmatprep.subr.mxu0 0.0
      %415 = vmatpush1.msra.mxu0 %v394
      %416 = vmatprep.subr.mxu0 0.0
      %417 = vmatpush1.msra.mxu0 %v395
      %418 = vmatprep.subr.mxu0 0.0
      %419 = vmatpush1.msra.mxu0 %v396
      %420 = vmatprep.subr.mxu0 0.0
      %421 = vmatpush1.msra.mxu0 %v397
      %422 = vmatprep.subr.mxu0 0.0
      %423 = vmatpush1.msra.mxu0 %v398
      %424 = vmatprep.subr.mxu0 0.0
      %425 = vmatpush1.msra.mxu0 %v399
      %426 = vmatprep.subr.mxu0 0.0
      %427 = vmatpush1.msra.mxu0 %v400
      %428 = vmatprep.subr.mxu0 0.0
      %429 = vmatpush1.msra.mxu0 0.0
      %430 = vmatprep.subr.mxu0 0.0
      %431 = vmatpush1.msra.mxu0 0.0
      %432 = vmatprep.subr.mxu0 0.0
      %433 = vmatpush1.msra.mxu0 0.0
      %434 = vmatprep.subr.mxu0 0.0
      %435 = vmatpush1.msra.mxu0 0.0
      %436 = vmatprep.subr.mxu0 0.0
      %437 = vmatpush1.msra.mxu0 0.0
      %438 = vmatprep.subr.mxu0 0.0
      %439 = vmatpush1.msra.mxu0 0.0
      %440 = vmatprep.subr.mxu0 0.0
      %441 = vmatpush1.msra.mxu0 0.0
      %442 = vmatprep.subr.mxu0 0.0
      %443 = vmatpush1.msra.mxu0 0.0
      %444 = vmatprep.subr.mxu0 0.0
      %445 = vmatpush1.msra.mxu0 0.0
      %446 = vmatprep.subr.mxu0 0.0
      %447 = vmatpush1.msra.mxu0 0.0
      %448 = vmatprep.subr.mxu0 0.0
      %449 = vmatpush1.msra.mxu0 0.0
      %450 = vmatprep.subr.mxu0 0.0
      %451 = vmatpush1.msra.mxu0 0.0
      %452 = vmatprep.subr.mxu0 0.0
      %453 = vmatpush1.msra.mxu0 0.0
      %454 = vmatprep.subr.mxu0 0.0
      %455 = vmatpush1.msra.mxu0 0.0
      %456 = vmatprep.subr.mxu0 0.0
      %457 = vmatpush1.msra.mxu0 0.0
      %458 = vmatprep.subr.mxu0 0.0
      %459 = vmatpush1.msra.mxu0 0.0
      %460 = vmatprep.subr.mxu0 0.0
      %461 = vmatpush1.msra.mxu0 0.0
      %462 = vmatprep.subr.mxu0 0.0
      %463 = vmatpush1.msra.mxu0 0.0
      %464 = vmatprep.subr.mxu0 0.0
      %465 = vmatpush1.msra.mxu0 0.0
      %466 = vmatprep.subr.mxu0 0.0
      %467 = vmatpush1.msra.mxu0 0.0
      %468 = vmatprep.subr.mxu0 0.0
      %469 = vmatpush1.msra.mxu0 0.0
      %470 = vmatprep.subr.mxu0 0.0
      %471 = vmatpush1.msra.mxu0 0.0
      %472 = vmatprep.subr.mxu0 0.0
      %473 = vmatpush1.msra.mxu0 0.0
      %474 = vmatprep.subr.mxu0 0.0
      %475 = vmatpush1.msra.mxu0 0.0
      %476 = vmatprep.mubr.f32.mxu0 0.0
      %477 = vmatmul.mubr.f32.gmra.mrb[0].mxu0 %v410
      %v478 = vpop.f32.mrb[0].mxu0
      %v479 = vadd.f32 %v406, %v478
      %v480 = vpop.f32.mrb[0].mxu0
      %481 = vdwg.mxu0
      %v482 = vmax.f32 %v479, 0.0
      %v483 = vld [vmem:[%s3] sm:$0xf]
      %v484 = vld [vmem:[%s4] sm:$0x1]
      %v486 = vlaneseq
      %v487 = vshrl.u32 %v486, 7
      %v488 = vsub.s32 0, %v487
      %v489 = vrot.slane %v484, %v488
      %vm491 = vcmask 31744
      %v493 = vsel %vm491, %v482, 0
      %vm495 = vcmask 1043456
      %v497 = vsel %vm495, %v483, 0
      %499 = vmatprep.subr.mxu0 0.0
      %500 = vmatpush1.msra.mxu0 %v497
      %501 = vmatprep.subr.mxu0 0.0
      %502 = vmatpush1.msra.mxu0 0.0
      %503 = vmatprep.subr.mxu0 0.0
      %504 = vmatpush1.msra.mxu0 0.0
      %505 = vmatprep.subr.mxu0 0.0
      %506 = vmatpush1.msra.mxu0 0.0
      %507 = vmatprep.subr.mxu0 0.0
      %508 = vmatpush1.msra.mxu0 0.0
      %509 = vmatprep.subr.mxu0 0.0
      %510 = vmatpush1.msra.mxu0 0.0
      %511 = vmatprep.subr.mxu0 0.0
      %512 = vmatpush1.msra.mxu0 0.0
      %513 = vmatprep.subr.mxu0 0.0
      %514 = vmatpush1.msra.mxu0 0.0
      %515 = vmatprep.subr.mxu0 0.0
      %516 = vmatpush1.msra.mxu0 0.0
      %517 = vmatprep.subr.mxu0 0.0
      %518 = vmatpush1.msra.mxu0 0.0
      %519 = vmatprep.subr.mxu0 0.0
      %520 = vmatpush1.msra.mxu0 0.0
      %521 = vmatprep.subr.mxu0 0.0
      %522 = vmatpush1.msra.mxu0 0.0
      %523 = vmatprep.subr.mxu0 0.0
      %524 = vmatpush1.msra.mxu0 0.0
      %525 = vmatprep.subr.mxu0 0.0
      %526 = vmatpush1.msra.mxu0 0.0
      %527 = vmatprep.subr.mxu0 0.0
      %528 = vmatpush1.msra.mxu0 0.0
      %529 = vmatprep.subr.mxu0 0.0
      %530 = vmatpush1.msra.mxu0 0.0
      %531 = vmatprep.subr.mxu0 0.0
      %532 = vmatpush1.msra.mxu0 0.0
      %533 = vmatprep.subr.mxu0 0.0
      %534 = vmatpush1.msra.mxu0 0.0
      %535 = vmatprep.subr.mxu0 0.0
      %536 = vmatpush1.msra.mxu0 0.0
      %537 = vmatprep.subr.mxu0 0.0
      %538 = vmatpush1.msra.mxu0 0.0
      %539 = vmatprep.subr.mxu0 0.0
      %540 = vmatpush1.msra.mxu0 0.0
      %541 = vmatprep.subr.mxu0 0.0
      %542 = vmatpush1.msra.mxu0 0.0
      %543 = vmatprep.subr.mxu0 0.0
      %544 = vmatpush1.msra.mxu0 0.0
      %545 = vmatprep.subr.mxu0 0.0
      %546 = vmatpush1.msra.mxu0 0.0
      %547 = vmatprep.subr.mxu0 0.0
      %548 = vmatpush1.msra.mxu0 0.0
      %549 = vmatprep.subr.mxu0 0.0
      %550 = vmatpush1.msra.mxu0 0.0
      %551 = vmatprep.subr.mxu0 0.0
      %552 = vmatpush1.msra.mxu0 0.0
      %553 = vmatprep.subr.mxu0 0.0
      %554 = vmatpush1.msra.mxu0 0.0
      %555 = vmatprep.subr.mxu0 0.0
      %556 = vmatpush1.msra.mxu0 0.0
      %557 = vmatprep.subr.mxu0 0.0
      %558 = vmatpush1.msra.mxu0 0.0
      %559 = vmatprep.subr.mxu0 0.0
      %560 = vmatpush1.msra.mxu0 0.0
      %561 = vmatprep.subr.mxu0 0.0
      %562 = vmatpush1.msra.mxu0 0.0
      %563 = vmatprep.mubr.f32.mxu0 0.0
      %564 = vmatmul.mubr.f32.gmra.mrb[0].mxu0 %v493
      %v565 = vpop.f32.mrb[0].mxu0
      %v566 = vadd.f32 %v489, %v565
      %v567 = vpop.f32.mrb[0].mxu0
      %568 = vdwg.mxu0
      %v570 = vrot.slane %v566, 2
      %v572 = vadd.f32 %v566, %v570
      %v573 = vxor.u32 %v572, 2147483648
      %v574 = vmul.f32 %v573, 1.442695
      %v575 = vpow.pop %v574
      %v576 = vadd.f32 %v575, 1.0
      %v577 = vrcp.pop %v576
      %v578 = vmul.f32 1.0, %v577
      %579 = vst.msk [vmem:[#allocation6] sm:$0x3] %vm237, %v578
    $region33: #{tpu_custom_call.1} parent=1 // pred_fallthru
      _
    // Predicated region
    $region34: #{tpu_custom_call.1} parent=1 // pred_check
      _
    $region35: #{tpu_custom_call.1} parent=1 // pred_check_branch
      %581 = sbr.rel (0) target = $region37
    $region36: #{tpu_custom_call.1} parent=1 // pred_region
      %s583 = ssub.s32 32, 32
      %584 = vsyncadd [#allocation5], %s583
      %s586 = sshll.u32 [#allocation6], 4
      %s587 = int_to_ptr.vmem [resolvable:$true] %s586
      %589 = dma.vmem_to_hbm [thread:$0]  %s587, 32, %s5, [#allocation5]
    $region37: #{tpu_custom_call.1} parent=1 // pred_fallthru
      _
    // Predicated region
    $region38: #{tpu_custom_call.1} parent=1 // pred_check
      _
    $region39: #{tpu_custom_call.1} parent=1 // pred_check_branch
      %591 = sbr.rel (0) target = $region41
    $region40: #{tpu_custom_call.1} parent=1 // pred_region
      %592 = dma.done [#allocation5], 32
    $region41: #{tpu_custom_call.1} parent=1 // pred_fallthru
      _
    %593 = vsyncpa [#allocation4], 1
    %594 = vsyncpa [#allocation5], 1

</llo_original>
